<compile_context>
chip_gen: v7x
topology: tpu7x:2x2x1
jax: 0.10.0
libtpu: 0.0.40
codegen_flags: <defaults>
</compile_context>

<pallas_src>
import functools
import math

import jax
import jax.numpy as jnp
from jax import lax
from jax.experimental import pallas as pl
from jax.experimental.pallas import tpu as pltpu


# ----------------------------- activations ---------------------------------
# JAX equivalents of ActivationHelper.ACTIVATIONS (gelu / softmax handled below).
_ACTIVATIONS = {
    "tanh": jnp.tanh,
    "relu": lambda x: jnp.maximum(x, 0.0),
    "elu": jax.nn.elu,
    "sigmoid": jax.nn.sigmoid,
    "linear": lambda x: x,
}


def _epilogue(acc_f32, bias_f32, act_name, gelu_exact):
    """bias add + activation, all in float32; caller casts at the store."""
    y = acc_f32 + bias_f32                              # (tm, tn) + (1, tn)
    if act_name == "gelu":
        if gelu_exact:
            # exact (erf) gelu, bit-matching torch.nn.functional.gelu default.
            y = 0.5 * y * (1.0 + lax.erf(y * (1.0 / math.sqrt(2.0))))
        else:
            # default: tanh approximation (routes most work to the EUP slot).
            y = jax.nn.gelu(y, approximate=True)
    elif act_name == "softmax":
        # only reached with a whole-Dout N block (enforced in _pick_tn).
        y = jax.nn.softmax(y, axis=-1)
    else:
        y = _ACTIVATIONS[act_name](y)
    return y


# ------------------------------- kernels -------------------------------------
def _affine_mnk_kernel(x_ref, w_ref, b_ref, o_ref, acc_ref, *,
                       act_name, gelu_exact, compute_dtype):
    # grid = (gm, gn, gk); K is the reduction ("arbitrary") axis.
    k = pl.program_id(2)

    @pl.when(k == 0)
    def _():
        acc_ref[...] = jnp.zeros_like(acc_ref)

    acc_ref[...] += jnp.dot(x_ref[...].astype(compute_dtype),
                            w_ref[...].astype(compute_dtype),
                            preferred_element_type=jnp.float32)

    @pl.when(k == pl.num_programs(2) - 1)
    def _():
        y = _epilogue(acc_ref[...], b_ref[...].astype(jnp.float32),
                      act_name, gelu_exact)
        o_ref[...] = y.astype(o_ref.dtype)


def _affine_mn_kernel(x_ref, w_ref, b_ref, o_ref, *,
                      act_name, gelu_exact, compute_dtype):
    # gk == 1 specialization: no f32 scratch accumulator read-modify-write.
    acc = jnp.dot(x_ref[...].astype(compute_dtype),
                  w_ref[...].astype(compute_dtype),
                  preferred_element_type=jnp.float32)
    y = _epilogue(acc, b_ref[...].astype(jnp.float32), act_name, gelu_exact)
    o_ref[...] = y.astype(o_ref.dtype)


def _affine_seg_kernel(*refs, seg_offs, act_name, gelu_exact, compute_dtype):
    # refs = (x_0..x_{S-1}, w, bias, out); grid = (gm, gn).
    # One resident (Din, tn) weight block; segments are static (free) slices of
    # it -- no per-segment HBM weight copies, torch.cat never materialized.
    nseg = len(seg_offs) - 1
    x_refs = refs[:nseg]
    w_ref = refs[nseg]
    b_ref = refs[nseg + 1]
    o_ref = refs[nseg + 2]

    acc = None
    for s in range(nseg):                       # trace-time unrolled split-K
        lo, hi = seg_offs[s], seg_offs[s + 1]
        part = jnp.dot(x_refs[s][...].astype(compute_dtype),
                       w_ref[lo:hi, :].astype(compute_dtype),
                       preferred_element_type=jnp.float32)
        acc = part if acc is None else acc + part
    y = _epilogue(acc, b_ref[...].astype(jnp.float32), act_name, gelu_exact)
    o_ref[...] = y.astype(o_ref.dtype)


# ----------------------------- tile selection --------------------------------
def _round_up(x, n):
    return ((x + n - 1) // n) * n


def _chip_defaults():
    """Generation-aware tile defaults, TensorCore count and VMEM capacity."""
    kind = ""
    try:
        kind = (jax.devices()[0].device_kind or "").lower()
    except Exception:
        pass
    if "v7" in kind:
        gen = 7
    elif "v6" in kind:
        gen = 6
    elif "v5" in kind:
        gen = 5
    else:
        gen = 6
    vmem_cap = (64 if gen >= 7 else 128) * 2**20
    try:
        cap = int(getattr(pltpu.get_tpu_info(), "vmem_capacity_bytes", 0) or 0)
        if cap > 0:
            vmem_cap = cap
    except Exception:
        pass
    num_tc = 2 if gen >= 7 else 1
    if gen >= 7:
        # 64 MiB VMEM, ~3.2 TB/s HBM -> crossover ~310 FLOP/B, smaller tk.
        tm, tn_max, tk_max = 1024, 1024, 1024
    elif gen == 6:
        # crossover ~660 FLOP/B -> go wide on both M and N.
        tm, tn_max, tk_max = 1024, 1024, 2048
    else:
        # v5e crossover ~240 FLOP/B.
        tm, tn_max, tk_max = 512, 512, 2048
    return tm, tn_max, tk_max, num_tc, vmem_cap


def _pick_tn(dout, tn_max, act_name):
    # softmax needs the whole row in one block; tiny Dout kept whole as well.
    if act_name == "softmax" or dout <= 128:
        return dout
    return max(128, min(tn_max, (dout // 128) * 128))


def _pick_tk(din, tk_max):
    """Returns (tk, padded_din); tk <= tk_max always and divides padded_din."""
    if din <= tk_max:
        return din, din
    for cand in (2048, 1024, 512, 256, 128):
        if cand <= tk_max and din % cand == 0:
            return cand, din
    # Awkward Din: zero-pad K (zero rows/cols contribute exactly zero) so the
    # x / W tiles stay bounded and K-pipelining survives any Din.
    tk = min(tk_max, 512)
    return tk, _round_up(din, tk)


def _vmem_limit(vmem_need, vmem_cap):
    # vmem_need already includes double buffering; add ~8 MiB of headroom for
    # compiler scratch and never ask for more than ~65% of physical VMEM.
    return int(min(0.65 * vmem_cap, max(32 * 2**20, vmem_need + 8 * 2**20)))


# ------------------------------- forward -------------------------------------
def z_affine_forward(inputs, weight_t, bias, *, act="linear", gelu_exact=False,
                     tm=None, tn_max=None, tk_max=None,
                     compute_dtype=jnp.bfloat16, out_dtype=None):
    """Eval-mode forward of ZAffineNode: concat -> Linear -> act -> dropout(id).

    inputs   : array (..., Din) or list/tuple of arrays concatenated along -1.
    weight_t : (Din, Dout) -- transpose of torch.nn.Linear's (Dout, Din);
               pre-cast it to bf16 once (e.g. at init) so no per-call cast pass.
    bias     : (Dout,)
    out_dtype: output dtype (default = input dtype; pass bf16 to halve writeback).
    """
    # TODO(synk): training-mode dropout not implemented (would use
    #             pltpu.prng_seed / pltpu.prng_random_bits inside the kernel).
    if not isinstance(inputs, (list, tuple)):
        inputs = [inputs]
    inputs = list(inputs)

    seg_dims = [int(x.shape[-1]) for x in inputs]
    din = sum(seg_dims)
    dw, dout = int(weight_t.shape[0]), int(weight_t.shape[1])
    assert dw == din, (dw, din)

    lead_shape = inputs[0].shape[:-1]
    m = math.prod(lead_shape) if lead_shape else 1
    if out_dtype is None:
        out_dtype = inputs[0].dtype

    x_itemsize = jnp.dtype(inputs[0].dtype).itemsize
    w_itemsize = jnp.dtype(weight_t.dtype).itemsize
    out_itemsize = jnp.dtype(out_dtype).itemsize

    tm_def, tn_max_def, tk_max_def, num_tc, vmem_cap = _chip_defaults()
    tm = tm_def if tm is None else tm
    tn_max = tn_max_def if tn_max is None else tn_max
    tk_max = tk_max_def if tk_max is None else tk_max

    # Row tile: large (amortizes ~0.35us/grid-step, raises arithmetic
    # intensity), clamped to the problem, kept a multiple of 8 sublanes.
    tm = max(8, min(_round_up(tm, 8), _round_up(m, 8)))
    tn = _pick_tn(dout, tn_max, act)
    gm = pl.cdiv(m, tm)
    gn = pl.cdiv(dout, tn)

    # v7x has 2 TensorCores fed by sharding "parallel" grid axes: a 1x1
    # parallel grid idles one TC, so split M (preferred) or N when worthwhile.
    if num_tc >= 2 and gm * gn < 2:
        if m >= 256:
            tm = _round_up(pl.cdiv(m, 2), 8)
            gm = pl.cdiv(m, tm)
        elif dout >= 256 and act != "softmax":
            tn = max(128, ((dout // 2) // 128) * 128)
            gn = pl.cdiv(dout, tn)

    b2 = bias.reshape(1, dout)

    cost = pl.CostEstimate(
        flops=2 * m * din * dout,
        transcendentals=(m * dout if act in ("gelu", "tanh", "sigmoid",
                                             "elu", "softmax") else 0),
        bytes_accessed=(m * din * x_itemsize + din * dout * w_itemsize
                        + dout * 4 + m * dout * out_itemsize),
    )

    # ----------------- choose fused-concat vs single-dot path ----------------
    fuse_segments = False
    x_cat = None
    if len(inputs) == 1:
        x_cat = inputs[0].reshape(m, din)
    else:
        # Tiny segments waste the MXU's native K (128/256) and pad to 128 lanes
        # (~5x wasted width for K=24/40); very large resident Din may not fit
        # VMEM (v7x: 64 MiB).  Either way, pre-concatenate and take the
        # single-dot (M,N[,K]) path; otherwise fuse the concat in-kernel.
        small = (din <= 512) or any(d < 128 for d in seg_dims)
        fused_vmem = (2 * tm * din * x_itemsize + 2 * din * tn * w_itemsize
                      + 2 * tm * tn * out_itemsize + 2 * tn * 4)
        if small or fused_vmem > 0.55 * vmem_cap:
            x_cat = jnp.concatenate(
                [x.reshape(m, d) for x, d in zip(inputs, seg_dims)], axis=-1)
        else:
            fuse_segments = True

    if not fuse_segments:
        # ---------------- single-dot path: (M, N[, K]) tiled matmul ----------
        # No wrapper-side casts: x is cast to compute_dtype inside the kernel
        # (hidden under the MXU); W should already be bf16 (cast once at init).
        tk, din_pad = _pick_tk(din, tk_max)
        w2 = weight_t
        if din_pad != din:
            x_cat = jnp.pad(x_cat, ((0, 0), (0, din_pad - din)))
            w2 = jnp.pad(w2, ((0, din_pad - din), (0, 0)))
        gk = din_pad // tk

        vmem_need = (2 * (tm * tk * x_itemsize + tk * tn * w_itemsize)
                     + 2 * tm * tn * out_itemsize + 2 * tn * 4
                     + (tm * tn * 4 if gk > 1 else 0))

        if gk == 1:
            # Small-Din specialization: no scratch accumulator traffic.
            kernel = functools.partial(_affine_mn_kernel, act_name=act,
                                       gelu_exact=gelu_exact,
                                       compute_dtype=compute_dtype)
            grid_spec = pltpu.PrefetchScalarGridSpec(
                num_scalar_prefetch=0,
                grid=(gm, gn),
                in_specs=[
                    pl.BlockSpec((tm, tk), lambda i, j: (i, 0)),   # x tile
                    pl.BlockSpec((tk, tn), lambda i, j: (0, j)),   # W tile
                    pl.BlockSpec((1, tn), lambda i, j: (0, j)),    # bias
                ],
                out_specs=pl.BlockSpec((tm, tn), lambda i, j: (i, j)),
            )
            semantics = ("parallel", "parallel")
        else:
            # TODO(synk): on v7x with small gk, pipeline_mode=pl.Buffered(3) on
            #             the W spec can hide exposed DMA latency (few %).
            kernel = functools.partial(_affine_mnk_kernel, act_name=act,
                                       gelu_exact=gelu_exact,
                                       compute_dtype=compute_dtype)
            grid_spec = pltpu.PrefetchScalarGridSpec(
                num_scalar_prefetch=0,
                grid=(gm, gn, gk),
                in_specs=[
                    pl.BlockSpec((tm, tk), lambda i, j, k: (i, k)),   # x tile
                    pl.BlockSpec((tk, tn), lambda i, j, k: (k, j)),   # W tile
                    pl.BlockSpec((1, tn), lambda i, j, k: (0, j)),    # bias
                ],
                out_specs=pl.BlockSpec((tm, tn), lambda i, j, k: (i, j)),
                scratch_shapes=[pltpu.VMEM((tm, tn), jnp.float32)],
            )
            semantics = ("parallel", "parallel", "arbitrary")

        out2 = pl.pallas_call(
            kernel,
            out_shape=jax.ShapeDtypeStruct((m, dout), out_dtype),
            grid_spec=grid_spec,
            compiler_params=pltpu.CompilerParams(
                dimension_semantics=semantics,
                vmem_limit_bytes=_vmem_limit(vmem_need, vmem_cap),
            ),
            cost_estimate=cost,
        )(x_cat, w2, b2)
    else:
        # -------- fused-concat path: per-segment dots, one weight block -------
        xs = [x.reshape(m, d) for x, d in zip(inputs, seg_dims)]
        offs = [0]
        for d in seg_dims:
            offs.append(offs[-1] + d)

        # x segment blocks (index (i, 0)) are invariant along the inner j
        # sweep; single-buffer them when they are the dominant VMEM term.
        # Weight/bias blocks change with j, so they keep default Buffered(2).
        x_bufs = 2
        x_spec_kwargs = {}
        if gn > 1 and tm * din * x_itemsize > (2 << 20):
            x_spec_kwargs = dict(pipeline_mode=pl.Buffered(1))
            x_bufs = 1

        in_specs = (
            [pl.BlockSpec((tm, d), lambda i, j: (i, 0), **x_spec_kwargs)
             for d in seg_dims]
            + [pl.BlockSpec((din, tn), lambda i, j: (0, j)),   # whole-Din W
               pl.BlockSpec((1, tn), lambda i, j: (0, j))]     # bias
        )
        vmem_need = (x_bufs * tm * din * x_itemsize
                     + 2 * din * tn * w_itemsize
                     + 2 * tm * tn * out_itemsize + 2 * tn * 4)

        kernel = functools.partial(_affine_seg_kernel, seg_offs=tuple(offs),
                                   act_name=act, gelu_exact=gelu_exact,
                                   compute_dtype=compute_dtype)
        out2 = pl.pallas_call(
            kernel,
            out_shape=jax.ShapeDtypeStruct((m, dout), out_dtype),
            grid_spec=pltpu.PrefetchScalarGridSpec(
                num_scalar_prefetch=0,
                grid=(gm, gn),
                in_specs=in_specs,
                out_specs=pl.BlockSpec((tm, tn), lambda i, j: (i, j)),
            ),
            compiler_params=pltpu.CompilerParams(
                dimension_semantics=("parallel", "parallel"),
                vmem_limit_bytes=_vmem_limit(vmem_need, vmem_cap),
            ),
            cost_estimate=cost,
        )(*xs, weight_t, b2)

    return out2.reshape(*lead_shape, dout)


# --------------------------- parameter init ---------------------------------
def init_affine_params(key, isize, osize, weight_dtype=jnp.bfloat16,
                       bias_dtype=jnp.float32):
    """torch.nn.Linear default init: U(-1/sqrt(fan_in), 1/sqrt(fan_in)).

    Weight is stored transposed as (Din, Dout) and pre-cast ONCE to bf16 so the
    forward never pays a per-call HBM cast pass; bias stays f32 for accuracy.
    """
    din = sum(int(z) for z in isize)
    bound = 1.0 / math.sqrt(din)
    kw, kb = jax.random.split(key)
    weight_t = jax.random.uniform(kw, (din, osize), jnp.float32, -bound, bound)
    bias = jax.random.uniform(kb, (osize,), jnp.float32, -bound, bound)
    return weight_t.astype(weight_dtype), bias.astype(bias_dtype)


# --------------------------------- main --------------------------------------
if __name__ == "__main__":
    key = jax.random.PRNGKey(0)
    k1, k2, k3, k4, k5, k6 = jax.random.split(key, 6)

    batch, seq = 2, 8
    osize = 256

    # ---- Case A: multi-input with small segments (isize=[24,40] -> Din=64).
    # Small segments are pre-concatenated and take the single-dot (gk==1,
    # no-scratch) kernel -- one K=64 dot instead of two tiny MXU-wasting dots.
    isize_a = [24, 40]
    act_a = "gelu"
    x1 = jax.random.normal(k1, (batch, seq, isize_a[0]), jnp.float32)
    x2 = jax.random.normal(k2, (batch, seq, isize_a[1]), jnp.float32)
    weight_a, bias_a = init_affine_params(k3, isize_a, osize)

    out_list = jax.block_until_ready(
        z_affine_forward([x1, x2], weight_a, bias_a, act=act_a))

    x_cat = jnp.concatenate([x1, x2], axis=-1)
    out_single = jax.block_until_ready(
        z_affine_forward(x_cat, weight_a, bias_a, act=act_a))

    # Reference at matching precision: bf16 operands, f32 accumulate/epilogue,
    # tanh-approx gelu (kernel default; exact erf is behind gelu_exact=True).
    xa = x_cat.astype(jnp.bfloat16).astype(jnp.float32)
    wa = weight_a.astype(jnp.float32)
    ref_a = jax.nn.gelu(xa @ wa + bias_a, approximate=True)

    assert out_list.shape == (batch, seq, osize)
    assert out_single.shape == (batch, seq, osize)
    assert jnp.allclose(out_list, ref_a, atol=2e-2, rtol=2e-2)
    assert jnp.allclose(out_single, ref_a, atol=2e-2, rtol=2e-2)

    # ---- Case B: multi-input with lane-wide segments (isize=[256,384]) ->
    # exercises the fused-concat kernel (one resident (Din, tn) weight block,
    # per-segment static slices, torch.cat never materialized).
    isize_b = [256, 384]
    act_b = "relu"
    xb1 = jax.random.normal(k4, (batch, seq, isize_b[0]), jnp.float32)
    xb2 = jax.random.normal(k5, (batch, seq, isize_b[1]), jnp.float32)
    weight_b, bias_b = init_affine_params(k6, isize_b, osize)

    out_fused = jax.block_until_ready(
        z_affine_forward([xb1, xb2], weight_b, bias_b, act=act_b))

    xcb = jnp.concatenate([xb1, xb2], axis=-1)
    yb = (xcb.astype(jnp.bfloat16).astype(jnp.float32)
          @ weight_b.astype(jnp.float32) + bias_b)
    ref_b = jnp.maximum(yb, 0.0)

    assert out_fused.shape == (batch, seq, osize)
    assert jnp.allclose(out_fused, ref_b, atol=2e-2, rtol=2e-2)

    print("KERNEL_OK")
</pallas_src>

<mosaic_0001>
module attributes {stable_mosaic.version = 11 : i64} {
  func.func @_affine_mn_kernel(%arg0: i32, %arg1: i32, %arg2: memref<16x64xf32, #tpu.memory_space<vmem>>, %arg3: memref<64x256xbf16, #tpu.memory_space<vmem>>, %arg4: memref<1x256xf32, #tpu.memory_space<vmem>>, %arg5: memref<16x256xf32, #tpu.memory_space<vmem>>) attributes {dimension_semantics = [#tpu.dimension_semantics<parallel>, #tpu.dimension_semantics<parallel>], iteration_bounds = array<i64: 1, 1>, scalar_prefetch = 0 : i64, scratch_operands = 0 : i64, tpu.core_type = #tpu.core_type<tc>, window_params = [{transform_indices = @transform_0, window_bounds = array<i64: 16, 64>}, {transform_indices = @transform_1, window_bounds = array<i64: 64, 256>}, {transform_indices = @transform_2, window_bounds = array<i64: 1, 256>}, {transform_indices = @transform_3, window_bounds = array<i64: 16, 256>}]} {
    %c0 = arith.constant 0 : index
    %c0_0 = arith.constant 0 : index
    %0 = vector.load %arg2[%c0, %c0_0] : memref<16x64xf32, #tpu.memory_space<vmem>>, vector<16x64xf32>
    %1 = arith.truncf %0 : vector<16x64xf32> to vector<16x64xbf16>
    %c0_1 = arith.constant 0 : index
    %c0_2 = arith.constant 0 : index
    %2 = vector.load %arg3[%c0_1, %c0_2] : memref<64x256xbf16, #tpu.memory_space<vmem>>, vector<64x256xbf16>
    %cst = arith.constant dense<0.000000e+00> : vector<16x256xf32>
    %3 = tpu.matmul %1, %2, %cst {dimension_numbers = #tpu.dot_dimension_numbers<[1], [0], [0], [1], [0, 0, 1, 1], [], []>} : vector<16x64xbf16>, vector<64x256xbf16>, vector<16x256xf32> -> vector<16x256xf32>
    %c0_3 = arith.constant 0 : index
    %c0_4 = arith.constant 0 : index
    %4 = vector.load %arg4[%c0_3, %c0_4] : memref<1x256xf32, #tpu.memory_space<vmem>>, vector<1x256xf32>
    %5 = vector.broadcast %4 : vector<1x256xf32> to vector<16x256xf32>
    %6 = arith.addf %3, %5 : vector<16x256xf32>
    %7 = arith.mulf %6, %6 : vector<16x256xf32>
    %8 = arith.mulf %6, %7 : vector<16x256xf32>
    %cst_5 = arith.constant 4.471500e-02 : f32
    %9 = vector.broadcast %cst_5 : f32 to vector<16x256xf32>
    %10 = arith.mulf %9, %8 : vector<16x256xf32>
    %11 = arith.addf %6, %10 : vector<16x256xf32>
    %cst_6 = arith.constant 0.797884583 : f32
    %12 = vector.broadcast %cst_6 : f32 to vector<16x256xf32>
    %13 = arith.mulf %12, %11 : vector<16x256xf32>
    %14 = math.tanh %13 : vector<16x256xf32>
    %cst_7 = arith.constant 1.000000e+00 : f32
    %15 = vector.broadcast %cst_7 : f32 to vector<16x256xf32>
    %16 = arith.addf %15, %14 : vector<16x256xf32>
    %cst_8 = arith.constant 5.000000e-01 : f32
    %17 = vector.broadcast %cst_8 : f32 to vector<16x256xf32>
    %18 = arith.mulf %17, %16 : vector<16x256xf32>
    %19 = arith.mulf %6, %18 : vector<16x256xf32>
    %c0_9 = arith.constant 0 : index
    %c0_10 = arith.constant 0 : index
    %20 = vector.load %arg5[%c0_9, %c0_10] : memref<16x256xf32, #tpu.memory_space<vmem>>, vector<16x256xf32>
    tpu.vector_store %arg5[%c0_9, %c0_10], %19 {strides = array<i32>} : memref<16x256xf32, #tpu.memory_space<vmem>>, vector<16x256xf32>,
    return
  }
  func.func @transform_0(%arg0: i32, %arg1: i32) -> (i32, i32) {
    %c0_i32 = arith.constant 0 : i32
    %c0_i32_0 = arith.constant 0 : i32
    return %arg0, %c0_i32 : i32, i32
  }
  func.func @transform_1(%arg0: i32, %arg1: i32) -> (i32, i32) {
    %c0_i32 = arith.constant 0 : i32
    %c0_i32_0 = arith.constant 0 : i32
    return %c0_i32, %arg1 : i32, i32
  }
  func.func @transform_2(%arg0: i32, %arg1: i32) -> (i32, i32) {
    %c0_i32 = arith.constant 0 : i32
    %c0_i32_0 = arith.constant 0 : i32
    return %c0_i32, %arg1 : i32, i32
  }
  func.func @transform_3(%arg0: i32, %arg1: i32) -> (i32, i32) {
    %c0_i32 = arith.constant 0 : i32
    return %arg0, %arg1 : i32, i32
  }
}

</mosaic_0001>

<llo_original>
// kernel: tpu_custom_call.1
$region0: #{tpu_custom_call.1}
  #allocation0 [shape = 'u32[]', space=smem, size = 0x4, offset = 0x4, fixed_abs, tag = 'smem constant byte address 0x4 - core index']
  #allocation1 [shape = 'u32[144,128]{1,0:T(1,128)}', space=vmem, size = 0x12000, scoped, tag = 'internal scratch']
  %s0 = inlined_call_operand.hbm [shape: f32[16,64], index: 0, kind: input, shape index: {}]
  %s1 = inlined_call_operand.hbm [shape: bf16[64,256], index: 1, kind: input, shape index: {}]
  %s2 = inlined_call_operand.vmem [shape: f32[1,256], index: 2, kind: input, shape index: {}]
  %s3 = inlined_call_operand.hbm [shape: f32[16,256], index: 3, kind: output, shape index: {}]
  %s4 = sld [smem:[#allocation0]]
  $region30: #{tpu_custom_call.1} parent=0
    _
  %s6 = ssub.s32 1, %s4
  %s7 = scalar_select 0, %s6, %s4
  $region1: #{tpu_custom_call.1} parent=0
    #allocation2 [shape = 'u8[8192]{0}', space=vmem, size = 0x2000, scoped, tag = 'input window, operand 0, single buffered']
    #allocation3 [shape = 's32[1]{0}', space=sflag, size = 0x4, scoped, tag = 'scoped memory for tpu_custom_call.1']
    #allocation4 [shape = 's32[1]{0}', space=sflag, size = 0x4, scoped, tag = 'scoped memory for tpu_custom_call.1']
    #allocation5 [shape = 'u8[32768]{0}', space=vmem, size = 0x8000, scoped, tag = 'input window, operand 1, single buffered']
    #allocation6 [shape = 's32[1]{0}', space=sflag, size = 0x4, scoped, tag = 'scoped memory for tpu_custom_call.1']
    #allocation7 [shape = 'u8[16384]{0}', space=vmem, size = 0x4000, scoped, tag = 'output window, operand 0, single buffered']
    %8 = vsyncpa [#allocation3], 0
    %9 = vsyncpa [#allocation6], 0
    %10 = vsyncpa [#allocation4], 0
    // Predicated region
    $region2: #{tpu_custom_call.1} parent=1 // pred_check
      _
    $region3: #{tpu_custom_call.1} parent=1 // pred_check_branch
      %12 = sbr.rel (0) target = $region5
    $region4: #{tpu_custom_call.1} parent=1 // pred_region
      %s14 = ssub.s32 256, 256
      %15 = vsyncadd [#allocation3], %s14
      %s16 = sshll.u32 [#allocation2], 4
      %s17 = int_to_ptr.vmem [resolvable:$true] %s16
      %22 = dma.hbm_to_vmem [thread:$0]  %s0, 256, %s17, [#allocation3], 128, 128, 8
    $region5: #{tpu_custom_call.1} parent=1 // pred_fallthru
      _
    // Predicated region
    $region6: #{tpu_custom_call.1} parent=1 // pred_check
      _
    $region7: #{tpu_custom_call.1} parent=1 // pred_check_branch
      %24 = sbr.rel (0) target = $region9
    $region8: #{tpu_custom_call.1} parent=1 // pred_region
      %s26 = ssub.s32 1024, 1024
      %27 = vsyncadd [#allocation6], %s26
      %s28 = sshll.u32 [#allocation5], 4
      %s29 = int_to_ptr.vmem [resolvable:$true] %s28
      %34 = dma.hbm_to_vmem [thread:$0]  %s1, 1024, %s29, [#allocation6], 128, 128, 8
    $region9: #{tpu_custom_call.1} parent=1 // pred_fallthru
      _
    // Predicated region
    $region10: #{tpu_custom_call.1} parent=1 // pred_check
      _
    $region11: #{tpu_custom_call.1} parent=1 // pred_check_branch
      %36 = sbr.rel (0) target = $region13
    $region12: #{tpu_custom_call.1} parent=1 // pred_region
      _
    $region13: #{tpu_custom_call.1} parent=1 // pred_fallthru
      _
    // Predicated region
    $region14: #{tpu_custom_call.1} parent=1 // pred_check
      _
    $region15: #{tpu_custom_call.1} parent=1 // pred_check_branch
      %38 = sbr.rel (0) target = $region17
    $region16: #{tpu_custom_call.1} parent=1 // pred_region
      %39 = dma.done [#allocation3], 256
    $region17: #{tpu_custom_call.1} parent=1 // pred_fallthru
      _
    // Predicated region
    $region18: #{tpu_custom_call.1} parent=1 // pred_check
      _
    $region19: #{tpu_custom_call.1} parent=1 // pred_check_branch
      %41 = sbr.rel (0) target = $region21
    $region20: #{tpu_custom_call.1} parent=1 // pred_region
      %42 = dma.done [#allocation6], 1024
    $region21: #{tpu_custom_call.1} parent=1 // pred_fallthru
      _
    %v44 = vld [vmem:[#allocation2] sm:$0xff]
    %v45 = vld [vmem:[#allocation2 + $0x8] sm:$0xff]
    %v46 = vpack.c.bf16 %v45, %v44
    %v47 = vld [vmem:[#allocation5] sm:$0xff]
    %v48 = vld [vmem:[#allocation5 + $0x8] sm:$0xff]
    %v49 = vld [vmem:[#allocation5 + $0x10] sm:$0xff]
    %v50 = vld [vmem:[#allocation5 + $0x18] sm:$0xff]
    %v51 = vld [vmem:[#allocation5 + $0x20] sm:$0xff]
    %v52 = vld [vmem:[#allocation5 + $0x28] sm:$0xff]
    %v53 = vld [vmem:[#allocation5 + $0x30] sm:$0xff]
    %v54 = vld [vmem:[#allocation5 + $0x38] sm:$0xff]
    %v55 = vld [vmem:[%s2] sm:$0x3]
    %v57 = vlaneseq
    %v58 = vshrl.u32 %v57, 7
    %v59 = vsub.s32 0, %v58
    %v60 = vrot.slane %v55, %v59
    %v61 = vlaneseq
    %v62 = vshrl.u32 %v61, 7
    %v63 = vsub.s32 1, %v62
    %v64 = vrot.slane %v55, %v63
    %v75 = vunpack.c.l.b16 %v47
    %v76 = vunpack.c.h.b16 %v47
    %v77 = vunpack.c.l.b16 %v48
    %v78 = vunpack.c.h.b16 %v48
    %v79 = vunpack.c.l.b16 %v49
    %v80 = vunpack.c.h.b16 %v49
    %v81 = vunpack.c.l.b16 %v50
    %v82 = vunpack.c.h.b16 %v50
    %v83 = vunpack.c.l.b16 %v51
    %v84 = vunpack.c.h.b16 %v51
    %v85 = vunpack.c.l.b16 %v52
    %v86 = vunpack.c.h.b16 %v52
    %v87 = vunpack.c.l.b16 %v53
    %v88 = vunpack.c.h.b16 %v53
    %v89 = vunpack.c.l.b16 %v54
    %v90 = vunpack.c.h.b16 %v54
    %v91 = vpack.c.b16 %v77, %v75
    %v92 = vpack.c.b16 %v78, %v76
    %v93 = vpack.c.b16 %v81, %v79
    %v94 = vpack.c.b16 %v82, %v80
    %v95 = vpack.c.b16 %v85, %v83
    %v96 = vpack.c.b16 %v86, %v84
    %v97 = vpack.c.b16 %v89, %v87
    %v98 = vpack.c.b16 %v90, %v88
    %vm107 = vcmask 523264
    %v109 = vsel %vm107, %v46, 0
    %111 = vmatprep.subr.bf16.mxu0 %v92
    %112 = vmatpush1.bf16.msra.mxu0 %v91
    %113 = vmatprep.subr.bf16.mxu0 %v94
    %114 = vmatpush1.bf16.msra.mxu0 %v93
    %115 = vmatprep.subr.bf16.mxu0 %v96
    %116 = vmatpush1.bf16.msra.mxu0 %v95
    %117 = vmatprep.subr.bf16.mxu0 %v98
    %118 = vmatpush1.bf16.msra.mxu0 %v97
    %119 = vmatprep.subr.bf16.mxu0 0
    %120 = vmatpush1.bf16.msra.mxu0 0
    %121 = vmatprep.subr.bf16.mxu0 0
    %122 = vmatpush1.bf16.msra.mxu0 0
    %123 = vmatprep.subr.bf16.mxu0 0
    %124 = vmatpush1.bf16.msra.mxu0 0
    %125 = vmatprep.subr.bf16.mxu0 0
    %126 = vmatpush1.bf16.msra.mxu0 0
    %127 = vmatprep.subr.bf16.mxu0 0
    %128 = vmatpush1.bf16.msra.mxu0 0
    %129 = vmatprep.subr.bf16.mxu0 0
    %130 = vmatpush1.bf16.msra.mxu0 0
    %131 = vmatprep.subr.bf16.mxu0 0
    %132 = vmatpush1.bf16.msra.mxu0 0
    %133 = vmatprep.subr.bf16.mxu0 0
    %134 = vmatpush1.bf16.msra.mxu0 0
    %135 = vmatprep.subr.bf16.mxu0 0
    %136 = vmatpush1.bf16.msra.mxu0 0
    %137 = vmatprep.subr.bf16.mxu0 0
    %138 = vmatpush1.bf16.msra.mxu0 0
    %139 = vmatprep.subr.bf16.mxu0 0
    %140 = vmatpush1.bf16.msra.mxu0 0
    %141 = vmatprep.subr.bf16.mxu0 0
    %142 = vmatpush1.bf16.msra.mxu0 0
    %143 = vmatprep.mubr.bf16.mxu0 0
    %144 = vmatmul.mubr.bf16.gmra.mrb[0].mxu0 %v109
    %v145 = vpop.f32.mrb[0].mxu0
    %v146 = vadd.f32 %v60, %v145
    %v147 = vpop.f32.mrb[0].mxu0
    %v148 = vadd.f32 %v64, %v147
    %v149 = vpop.f32.mrb[0].mxu0
    %v150 = vadd.f32 %v60, %v149
    %v151 = vpop.f32.mrb[0].mxu0
    %v152 = vadd.f32 %v64, %v151
    %153 = vdwg.mxu0
    %v154 = vmul.f32 %v146, %v146
    %v155 = vmul.f32 %v148, %v148
    %v156 = vmul.f32 %v150, %v150
    %v157 = vmul.f32 %v152, %v152
    %v158 = vmul.f32 %v146, %v154
    %v159 = vmul.f32 %v148, %v155
    %v160 = vmul.f32 %v150, %v156
    %v161 = vmul.f32 %v152, %v157
    %v162 = vmul.f32 %v158, 0.044715
    %v163 = vmul.f32 %v159, 0.044715
    %v164 = vmul.f32 %v160, 0.044715
    %v165 = vmul.f32 %v161, 0.044715
    %v166 = vadd.f32 %v146, %v162
    %v167 = vadd.f32 %v148, %v163
    %v168 = vadd.f32 %v150, %v164
    %v169 = vadd.f32 %v152, %v165
    %v170 = vmul.f32 %v166, 0.7978846
    %v171 = vmul.f32 %v167, 0.7978846
    %v172 = vmul.f32 %v168, 0.7978846
    %v173 = vmul.f32 %v169, 0.7978846
    %v174 = vtanh.pop %v170
    %v175 = vtanh.pop %v171
    %v176 = vtanh.pop %v172
    %v177 = vtanh.pop %v173
    %v178 = vadd.f32 %v174, 1.0
    %v179 = vadd.f32 %v175, 1.0
    %v180 = vadd.f32 %v176, 1.0
    %v181 = vadd.f32 %v177, 1.0
    %v182 = vmul.f32 %v178, 0.5
    %v183 = vmul.f32 %v179, 0.5
    %v184 = vmul.f32 %v180, 0.5
    %v185 = vmul.f32 %v181, 0.5
    %v186 = vmul.f32 %v146, %v182
    %v187 = vmul.f32 %v148, %v183
    %v188 = vmul.f32 %v150, %v184
    %v189 = vmul.f32 %v152, %v185
    %190 = vst [vmem:[#allocation7] sm:$0xff] %v186
    %191 = vst [vmem:[#allocation7 + $0x8] sm:$0xff] %v187
    %192 = vst [vmem:[#allocation7 + $0x10] sm:$0xff] %v188
    %193 = vst [vmem:[#allocation7 + $0x18] sm:$0xff] %v189
    // Predicated region
    $region22: #{tpu_custom_call.1} parent=1 // pred_check
      _
    $region23: #{tpu_custom_call.1} parent=1 // pred_check_branch
      %195 = sbr.rel (0) target = $region25
    $region24: #{tpu_custom_call.1} parent=1 // pred_region
      %s197 = ssub.s32 512, 512
      %198 = vsyncadd [#allocation4], %s197
      %s199 = sshll.u32 [#allocation7], 4
      %s200 = int_to_ptr.vmem [resolvable:$true] %s199
      %205 = dma.vmem_to_hbm [thread:$0]  %s200, 512, %s3, [#allocation4], 256, 256, 16
    $region25: #{tpu_custom_call.1} parent=1 // pred_fallthru
      _
    // Predicated region
    $region26: #{tpu_custom_call.1} parent=1 // pred_check
      _
    $region27: #{tpu_custom_call.1} parent=1 // pred_check_branch
      %207 = sbr.rel (0) target = $region29
    $region28: #{tpu_custom_call.1} parent=1 // pred_region
      %208 = dma.done [#allocation4], 512
    $region29: #{tpu_custom_call.1} parent=1 // pred_fallthru
      _
    %209 = vsyncpa [#allocation3], 1
    %210 = vsyncpa [#allocation6], 1
    %211 = vsyncpa [#allocation4], 1

</llo_original>
